<compile_context>
chip_gen: v5e
topology: v5e:2x2
jax: 0.10.0
libtpu: 0.0.40
codegen_flags: <defaults>
</compile_context>

<pallas_src>
import functools

import jax
import jax.numpy as jnp
from jax.experimental import pallas as pl
from jax.experimental.pallas import tpu as pltpu


_HBM_TILE_BYTES = 8 * 1024 * 1024       # raw HBM bytes of logits per tile
_VMEM_F32_TILE_BYTES = 6 * 1024 * 1024  # lane-padded f32 working-tile budget


def _pick_tile_rows(n: int, c: int, itemsize: int) -> int:
    """Rows per tile: dtype-aware HBM target + lane-padded VMEM budget, mult of 8."""
    c_lanes = max(128, ((c + 127) // 128) * 128)        # VMEM lane padding of C
    tn_hbm = _HBM_TILE_BYTES // max(1, c * itemsize)    # ~8 MiB raw DMA per tile
    tn_vmem = _VMEM_F32_TILE_BYTES // (4 * c_lanes)     # keep f32 tile ~6 MiB
    tn = max(8, min(tn_hbm, tn_vmem))
    tn = (tn // 8) * 8
    # Keep the block within the (8-aligned) batch so only the final partial
    # block ever needs masking.
    cap = max(8, (n // 8) * 8)
    return max(8, min(tn, cap))


def _dice_loss_kernel(logits_ref, target_ref, out_ref, *, n_true, tile_rows):
    step = pl.program_id(0)  # reduction axis over row tiles

    # Resident accumulator: output block index is constant across the grid,
    # so zero it on the first step.
    @pl.when(step == 0)
    def _():
        out_ref[...] = jnp.zeros_like(out_ref)

    logits = logits_ref[...].astype(jnp.float32)        # [TN, C]
    target = target_ref[...]                            # [TN, 1] int32

    # Numerically-stable softmax pieces; never materialize prob = e / denom.
    m = jnp.max(logits, axis=1, keepdims=True)          # [TN, 1]
    e = jnp.exp(logits - m)                             # [TN, C]
    denom = jnp.sum(e, axis=1, keepdims=True)           # [TN, 1]

    # torch.gather(prob, 1, target[:, None]) numerator via a one-hot mask on e.
    col = jax.lax.broadcasted_iota(jnp.int32, e.shape, 1)            # [TN, C]
    num = jnp.sum(jnp.where(col == target, e, 0.0), axis=1, keepdims=True)

    # Folded per-row epilogue (p = num/denom, q = (1-p)p, dsc = 1 - q/(q+1)):
    #   dsc = 1/(q+1) = denom^2 / ((denom - num) * num + denom^2)
    # One exact divide + a few muls on the lane-sparse [TN, 1] values.
    d2 = denom * denom
    dsc = d2 / ((denom - num) * num + d2)               # [TN, 1]

    def _acc_plain():
        out_ref[...] += jnp.sum(dsc, axis=0, keepdims=True)

    if n_true % tile_rows != 0:
        # Only the final (partial) block can hold rows >= n_true; its tail rows
        # are undefined (no wrapper pad), so mask by global row index there.
        last = pl.num_programs(0) - 1

        @pl.when(step == last)
        def _():
            row = step * tile_rows + jax.lax.broadcasted_iota(
                jnp.int32, dsc.shape, 0)
            masked = jnp.where(row < n_true, dsc, 0.0)
            out_ref[...] += jnp.sum(masked, axis=0, keepdims=True)

        @pl.when(step != last)
        def _():
            _acc_plain()
    else:
        _acc_plain()


def dice_loss(logits: jax.Array, target: jax.Array, tile_rows: int | None = None):
    """logits: [N, C] float (f32 or bf16); target: [N] int. Returns f32 scalar."""
    n_true, c = logits.shape
    n = n_true
    target2d = target.astype(jnp.int32).reshape(n, 1)

    # Only pad when N < 8 (minimum sublane granularity); otherwise rely on
    # Pallas partial-block handling + in-kernel row masking (no HBM pad copy).
    if n < 8:
        pad = 8 - n
        logits = jnp.pad(logits, ((0, pad), (0, 0)))
        target2d = jnp.pad(target2d, ((0, pad), (0, 0)))
        n = 8

    tn = _pick_tile_rows(n, c, logits.dtype.itemsize) if tile_rows is None else tile_rows
    steps = pl.cdiv(n, tn)

    kernel = functools.partial(_dice_loss_kernel, n_true=n_true, tile_rows=tn)

    total = pl.pallas_call(
        kernel,
        out_shape=jax.ShapeDtypeStruct((1, 1), jnp.float32),
        grid=(steps,),
        in_specs=[
            pl.BlockSpec((tn, c), lambda i: (i, 0)),
            pl.BlockSpec((tn, 1), lambda i: (i, 0)),
        ],
        out_specs=pl.BlockSpec((1, 1), lambda i: (0, 0)),
        compiler_params=pltpu.CompilerParams(
            dimension_semantics=("arbitrary",),
            vmem_limit_bytes=48 * 1024 * 1024,
        ),
        cost_estimate=pl.CostEstimate(
            flops=6 * n_true * c,
            transcendentals=n_true * c,
            bytes_accessed=n_true * c * logits.dtype.itemsize + n_true * 4 + 4,
        ),
    )(logits, target2d)

    # Mean over the true batch size.
    return total[0, 0] / jnp.float32(n_true)


def _dice_loss_ref(logits, target):
    prob = jax.nn.softmax(logits.astype(jnp.float32), axis=1)
    p = jnp.take_along_axis(prob, target[:, None].astype(jnp.int32), axis=1)
    q = (1.0 - p) * p
    dsc = 1.0 - q / (q + 1.0)
    return jnp.mean(dsc)


if __name__ == "__main__":
    key = jax.random.PRNGKey(0)
    k1, k2, k3, k4 = jax.random.split(key, 4)

    # Small shape matching the module spec: logits [N, C], target [N].
    N, C = 8, 32
    logits = jax.random.normal(k1, (N, C), dtype=jnp.float32)
    target = jax.random.randint(k2, (N,), 0, C, dtype=jnp.int32)

    loss = dice_loss(logits, target)
    jax.block_until_ready(loss)
    ref = _dice_loss_ref(logits, target)
    assert jnp.allclose(loss, ref, atol=1e-5, rtol=1e-5), (loss, ref)

    # Second check: ragged N with a forced small tile to exercise the grid,
    # the no-pad partial last block, and the pad-row mask branch.
    N2, C2 = 50, 40
    logits2 = jax.random.normal(k3, (N2, C2), dtype=jnp.float32)
    target2 = jax.random.randint(k4, (N2,), 0, C2, dtype=jnp.int32)

    loss2 = dice_loss(logits2, target2, tile_rows=16)
    jax.block_until_ready(loss2)
    ref2 = _dice_loss_ref(logits2, target2)
    assert jnp.allclose(loss2, ref2, atol=1e-5, rtol=1e-5), (loss2, ref2)

    print("KERNEL_OK")
</pallas_src>

<mosaic_0001>
module attributes {stable_mosaic.version = 11 : i64} {
  func.func @_dice_loss_kernel(%arg0: i32, %arg1: memref<8x32xf32, #tpu.memory_space<vmem>>, %arg2: memref<8x1xi32, #tpu.memory_space<vmem>>, %arg3: memref<1x1xf32, #tpu.memory_space<vmem>>) attributes {dimension_semantics = [#tpu.dimension_semantics<arbitrary>], iteration_bounds = array<i64: 1>, scalar_prefetch = 0 : i64, scratch_operands = 0 : i64, tpu.core_type = #tpu.core_type<tc>, window_params = [{transform_indices = @transform_0, window_bounds = array<i64: 8, 32>}, {transform_indices = @transform_1, window_bounds = array<i64: 8, 1>}, {pipeline_mode = #tpu.pipeline_mode<synchronous>, transform_indices = @transform_2, window_bounds = array<i64: 1, 1>}]} {
    %c0_i32 = arith.constant 0 : i32
    %0 = arith.cmpi eq, %arg0, %c0_i32 : i32
    %1 = arith.extui %0 : i1 to i32
    %c0_i32_0 = arith.constant 0 : i32
    %2 = arith.cmpi ne, %1, %c0_i32_0 : i32
    scf.if %2 {
      %cst_12 = arith.constant 0.000000e+00 : f32
      %29 = vector.broadcast %cst_12 : f32 to vector<1x1xf32>
      %c0_13 = arith.constant 0 : index
      %c0_14 = arith.constant 0 : index
      %30 = vector.load %arg3[%c0_13, %c0_14] : memref<1x1xf32, #tpu.memory_space<vmem>>, vector<1x1xf32>
      tpu.vector_store %arg3[%c0_13, %c0_14], %29 {strides = array<i32>} : memref<1x1xf32, #tpu.memory_space<vmem>>, vector<1x1xf32>,
    } else {
    }
    %c0 = arith.constant 0 : index
    %c0_1 = arith.constant 0 : index
    %3 = vector.load %arg1[%c0, %c0_1] : memref<8x32xf32, #tpu.memory_space<vmem>>, vector<8x32xf32>
    %c0_2 = arith.constant 0 : index
    %c0_3 = arith.constant 0 : index
    %4 = vector.load %arg2[%c0_2, %c0_3] : memref<8x1xi32, #tpu.memory_space<vmem>>, vector<8x1xi32>
    %cst = arith.constant dense<0xFF800000> : vector<8xf32>
    %5 = vector.multi_reduction <maximumf>, %3, %cst [1] : vector<8x32xf32> to vector<8xf32>
    %6 = vector.shape_cast %5 : vector<8xf32> to vector<8x1xf32>
    %7 = vector.broadcast %6 : vector<8x1xf32> to vector<8x32xf32>
    %8 = arith.subf %3, %7 : vector<8x32xf32>
    %9 = math.exp %8 : vector<8x32xf32>
    %cst_4 = arith.constant dense<0.000000e+00> : vector<8xf32>
    %10 = vector.multi_reduction <add>, %9, %cst_4 [1] : vector<8x32xf32> to vector<8xf32>
    %11 = vector.shape_cast %10 : vector<8xf32> to vector<8x1xf32>
    %12 = tpu.iota {dimensions = array<i32: 1>} : vector<8x32xi32>
    %13 = vector.broadcast %4 : vector<8x1xi32> to vector<8x32xi32>
    %14 = arith.cmpi eq, %12, %13 : vector<8x32xi32>
    %cst_5 = arith.constant 0.000000e+00 : f32
    %15 = vector.broadcast %cst_5 : f32 to vector<8x32xf32>
    %16 = arith.select %14, %9, %15 : vector<8x32xi1>, vector<8x32xf32>
    %cst_6 = arith.constant dense<0.000000e+00> : vector<8xf32>
    %17 = vector.multi_reduction <add>, %16, %cst_6 [1] : vector<8x32xf32> to vector<8xf32>
    %18 = vector.shape_cast %17 : vector<8xf32> to vector<8x1xf32>
    %19 = arith.mulf %11, %11 : vector<8x1xf32>
    %20 = arith.subf %11, %18 : vector<8x1xf32>
    %21 = arith.mulf %20, %18 : vector<8x1xf32>
    %22 = arith.addf %21, %19 : vector<8x1xf32>
    %23 = arith.divf %19, %22 : vector<8x1xf32>
    %c0_7 = arith.constant 0 : index
    %c0_8 = arith.constant 0 : index
    %24 = vector.load %arg3[%c0_7, %c0_8] : memref<1x1xf32, #tpu.memory_space<vmem>>, vector<1x1xf32>
    %cst_9 = arith.constant dense<0.000000e+00> : vector<1xf32>
    %25 = vector.multi_reduction <add>, %23, %cst_9 [0] : vector<8x1xf32> to vector<1xf32>
    %26 = vector.shape_cast %25 : vector<1xf32> to vector<1x1xf32>
    %27 = arith.addf %24, %26 : vector<1x1xf32>
    %c0_10 = arith.constant 0 : index
    %c0_11 = arith.constant 0 : index
    %28 = vector.load %arg3[%c0_10, %c0_11] : memref<1x1xf32, #tpu.memory_space<vmem>>, vector<1x1xf32>
    tpu.vector_store %arg3[%c0_10, %c0_11], %27 {strides = array<i32>} : memref<1x1xf32, #tpu.memory_space<vmem>>, vector<1x1xf32>,
    return
  }
  func.func @transform_0(%arg0: i32) -> (i32, i32) {
    %c0_i32 = arith.constant 0 : i32
    %c0_i32_0 = arith.constant 0 : i32
    return %arg0, %c0_i32 : i32, i32
  }
  func.func @transform_1(%arg0: i32) -> (i32, i32) {
    %c0_i32 = arith.constant 0 : i32
    %c0_i32_0 = arith.constant 0 : i32
    return %arg0, %c0_i32 : i32, i32
  }
  func.func @transform_2(%arg0: i32) -> (i32, i32) {
    %c0_i32 = arith.constant 0 : i32
    %c0_i32_0 = arith.constant 0 : i32
    %c0_i32_1 = arith.constant 0 : i32
    return %c0_i32, %c0_i32_0 : i32, i32
  }
}

</mosaic_0001>

<llo_original>
// kernel: tpu_custom_call.1
$region0: #{tpu_custom_call.1}
  #allocation0 [shape = 'u32[]', space=smem, size = 0x4, offset = 0x4, fixed_abs, tag = 'smem constant byte address 0x4 - core index']
  #allocation1 [shape = 'u32[72,128]{1,0:T(1,128)}', space=vmem, size = 0x9000, scoped, tag = 'internal scratch']
  %s0 = inlined_call_operand.vmem [shape: f32[8,32], index: 0, kind: input, shape index: {}]
  %s1 = inlined_call_operand.vmem [shape: s32[8,1], index: 1, kind: input, shape index: {}]
  %s2 = inlined_call_operand.hbm [shape: f32[1,1], index: 2, kind: output, shape index: {}]
  %s3 = sld [smem:[#allocation0]]
  $region22: #{tpu_custom_call.1} parent=0
    _
  %s5 = ssub.s32 1, %s3
  %s6 = scalar_select 0, %s5, %s3
  $region1: #{tpu_custom_call.1} parent=0
    #allocation2 [shape = 'u8[512]{0}', space=vmem, size = 0x400, scoped, tag = 'output window, operand 0, single buffered']
    #allocation3 [shape = 's32[1]{0}', space=sflag, size = 0x4, scoped, tag = 'scoped memory for tpu_custom_call.1']
    %7 = vsyncpa [#allocation3], 0
    // Predicated region
    $region2: #{tpu_custom_call.1} parent=1 // pred_check
      _
    $region3: #{tpu_custom_call.1} parent=1 // pred_check_branch
      %9 = sbr.rel (0) target = $region5
    $region4: #{tpu_custom_call.1} parent=1 // pred_region
      _
    $region5: #{tpu_custom_call.1} parent=1 // pred_fallthru
      _
    // Predicated region
    $region6: #{tpu_custom_call.1} parent=1 // pred_check
      _
    $region7: #{tpu_custom_call.1} parent=1 // pred_check_branch
      %11 = sbr.rel (0) target = $region9
    $region8: #{tpu_custom_call.1} parent=1 // pred_region
      _
    $region9: #{tpu_custom_call.1} parent=1 // pred_fallthru
      _
    %p12 = scmp.eq.s32.totalorder 0, 0
    // Predicated region
    $region10: #{tpu_custom_call.1} parent=1 // pred_check
      %p13 = pneg %p12
    $region11: #{tpu_custom_call.1} parent=1 // pred_check_branch
      %15 = sbr.rel (%p13) target = $region13
    $region12: #{tpu_custom_call.1} parent=1 // pred_region
      %vm16 = vcmask 0
      %17 = vst.msk [vmem:[#allocation2] sm:$0x1] %vm16, 0.0
    $region13: #{tpu_custom_call.1} parent=1 // pred_fallthru
      _
    %v18 = vld [vmem:[%s0] sm:$0xff]
    %v19 = vld [vmem:[%s1] sm:$0xff]
    %vm20 = vcmask 261120
    %v21 = vsel %vm20, %v18, -inf
    %22 = vmax.xlane.f32.xlu0 %v21
    %v23 = vpop.xlane.xlu0 %22
    %v24 = vsub.f32 %v18, %v23
    %v25 = vmul.f32 %v24, 1.442695
    %v26 = vpow.pop %v25
    %v27 = vsel %vm20, %v26, 0.0
    %28 = vadd.xlane.f32.xlu0 %v27
    %v29 = vpop.xlane.xlu0 %28
    %v30 = vlaneseq
    %v31 = vand.u32 %v30, 127
    %32 = vset.pattern.permute.xlu0 0
    %33 = vperm.xlu0 %32, %v19
    %v34 = vpop.permute.xlu0 %33
    %vm35 = vcmp.eq.s32.totalorder %v31, %v34
    %v36 = vsel %vm35, %v26, 0.0
    %v37 = vsel %vm20, %v36, 0.0
    %38 = vadd.xlane.f32.xlu0 %v37
    %v39 = vpop.xlane.xlu0 %38
    %v40 = vmul.f32 %v29, %v29
    %v41 = vsub.f32 %v29, %v39
    %v42 = vmul.f32 %v41, %v39
    %v43 = vadd.f32 %v42, %v40
    %v44 = vrcp.pop %v43
    %v45 = vmul.f32 %v43, %v44
    %v46 = vsub.f32 1.0, %v45
    %v47 = vmul.f32 %v44, %v46
    %v48 = vadd.f32 %v44, %v47
    %vm49 = vweird.f32 %v43
    %vm50 = vweird.f32 %v44
    %vm51 = vmor %vm49, %vm50
    %v52 = vsel %vm51, %v44, %v48
    %v53 = vand.u32 2147483647, %v43
    %vm54 = vcmp.eq.f32.partialorder %v53, 8.507059e+37
    %v55 = vand.u32 %v43, 2147483648
    %v56 = vor.u32 1.1754944e-38, %v55
    %v57 = vsel %vm54, %v56, %v52
    %v58 = vmul.f32 %v40, %v57
    %v59 = vld [vmem:[#allocation2] sm:$0x1]
    %v60 = vrot.slane %v58, 4
    %v61 = vadd.f32 %v58, %v60
    %v62 = vrot.slane %v61, 2
    %v63 = vadd.f32 %v61, %v62
    %v64 = vrot.slane %v63, 1
    %v65 = vadd.f32 %v63, %v64
    %v66 = vadd.f32 %v59, %v65
    %vm67 = vcmask 0
    %68 = vst.msk [vmem:[#allocation2] sm:$0x1] %vm67, %v66
    // Predicated region
    $region14: #{tpu_custom_call.1} parent=1 // pred_check
      _
    $region15: #{tpu_custom_call.1} parent=1 // pred_check_branch
      %70 = sbr.rel (0) target = $region17
    $region16: #{tpu_custom_call.1} parent=1 // pred_region
      %72 = vsyncadd [#allocation3], 0
      %s74 = sshll.u32 [#allocation2], 4
      %s75 = int_to_ptr.vmem [resolvable:$true] %s74
      %s76 = sshll.u32 %s2, 4
      %s77 = int_to_ptr.hbm [resolvable:$true] %s76
      %79 = dma.vmem_to_hbm [thread:$0]  %s75, 16, %s77, [#allocation3]
    $region17: #{tpu_custom_call.1} parent=1 // pred_fallthru
      _
    // Predicated region
    $region18: #{tpu_custom_call.1} parent=1 // pred_check
      _
    $region19: #{tpu_custom_call.1} parent=1 // pred_check_branch
      %81 = sbr.rel (0) target = $region21
    $region20: #{tpu_custom_call.1} parent=1 // pred_region
      %83 = dma.done [#allocation3], 16
    $region21: #{tpu_custom_call.1} parent=1 // pred_fallthru
      _
    %84 = vsyncpa [#allocation3], 1

</llo_original>
